<compile_context>
chip_gen: v7x
topology: tpu7x:2x2x1
jax: 0.10.0
libtpu: 0.0.40
codegen_flags: <defaults>
</compile_context>

<pallas_src>
import functools

import jax
import jax.numpy as jnp
from jax.experimental import pallas as pl
from jax.experimental.pallas import tpu as pltpu


_IN_TILE_BUDGET_BYTES = 8 * 1024 * 1024   # per streamed-input buffer (x2 double-buffer)


# ---------------------------------------------------------------------------
# Small helpers
# ---------------------------------------------------------------------------
def _round_up(x, m):
    return -(-x // m) * m


@functools.lru_cache(maxsize=1)
def _vmem_limit_bytes():
    """Per-generation scoped-VMEM limit: 96 MiB on v5e/v6e (128 MiB physical),
    <=48 MiB on v7x (64 MiB physical)."""
    try:
        info = pltpu.get_tpu_info()
        cap = int(getattr(info, "vmem_capacity_bytes", 64 * 1024 * 1024))
    except Exception:  # non-TPU / query unavailable: assume the smallest (v7x)
        cap = 64 * 1024 * 1024
    if cap >= 96 * 1024 * 1024:
        return 96 * 1024 * 1024
    return min(48 * 1024 * 1024, (3 * cap) // 4)


def _choose_dense_row_tile(n, h, itemsize, budget):
    """Row tile for the 2-D dense path: biggest MXU-aligned tile that fits the
    streaming budget, capped so the 'parallel' axis has >=2 blocks (v7x)."""
    max_rows = max(8, budget // max(1, h * itemsize))
    tb = min(1024, max_rows)
    if tb >= 256:
        tb -= tb % 256           # MXU-row aligned (2x256^2 on v6e/v7x, /128 on v5e)
    else:
        tb -= tb % 8
    if n >= 16:                  # keep >=2 grid blocks so both v7x TCs get work
        tb = min(tb, _round_up(-(-n // 2), 8))
    tb = min(tb, _round_up(n, 8))
    return max(8, tb)


def _pick_batch_tile(b, cap=64):
    """Batch tile for the pooled path.  Returns (tile, padded_batch) with
    tile a multiple of 8 that divides padded_batch (fixes the (8,128) rule)."""
    cap = max(8, cap - cap % 8)
    if b >= 16:
        cap = min(cap, max(8, (b // 2) - (b // 2) % 8))  # >=2 blocks for v7x megacore
    hi = min(cap, b)
    hi -= hi % 8
    for t in range(hi, 7, -8):
        if b % t == 0:
            return t, b
    return 8, _round_up(b, 8)    # pad batch to a multiple of 8; tile 8 = minimal waste


def _pick_divisor_rows(n, max_tile):
    """Largest multiple-of-8 divisor of n that is <= max_tile; falls back to the
    full extent n (a full-extent block always satisfies the layout rule)."""
    if n <= max(8, max_tile):
        return n
    hi = max_tile - max_tile % 8
    for t in range(hi, 7, -8):
        if n % t == 0:
            return t
    return n


# ---------------------------------------------------------------------------
# Shared epilogue: Linear(H->H, bias) -> tanh -> LayerNorm(H)
# ---------------------------------------------------------------------------
def _dense_tanh_ln(x, w_t, bias, gamma, beta, eps):
    # x: (N, H_in); w_t: (H_in, H_out) in MXU dtype; bias/gamma/beta: (1, H_out) f32.
    y = jnp.dot(x.astype(w_t.dtype), w_t, preferred_element_type=jnp.float32)
    y = jnp.tanh(y + bias)                                    # EUP slot
    # One-pass LayerNorm: var = E[y^2] - mu^2 (safe: y = tanh(.) in (-1, 1)).
    inv_h = 1.0 / y.shape[-1]
    mu = jnp.sum(y, axis=-1, keepdims=True) * inv_h
    ms = jnp.sum(y * y, axis=-1, keepdims=True) * inv_h
    var = jnp.maximum(ms - mu * mu, 0.0)
    y = (y - mu) * jax.lax.rsqrt(var + eps)
    return y * gamma + beta


# ---------------------------------------------------------------------------
# Kernel 1: rows already pooled (cls) or per-token (pool=False).
# grid=(num_row_tiles,) "parallel"; each step: (TB, H) -> (TB, H).
# ---------------------------------------------------------------------------
def _dense_head_kernel(x_ref, w_ref, b_ref, g_ref, beta_ref, o_ref, *, eps):
    y = _dense_tanh_ln(x_ref[...], w_ref[...], b_ref[...], g_ref[...],
                       beta_ref[...], eps)
    # TODO(synk): training-mode dropout (pltpu.prng_*) not needed for fwd eval.
    o_ref[...] = y.astype(o_ref.dtype)


# ---------------------------------------------------------------------------
# Kernel 2: mean/max pooling with S as a grid reduction axis.
# grid=(num_b_tiles, num_s_tiles); S is last and "arbitrary".
# ---------------------------------------------------------------------------
def _pool_reduce_head_kernel(h_ref, w_ref, b_ref, g_ref, beta_ref, o_ref,
                             acc_ref, *, pooling_type, seq_len, eps):
    s = pl.program_id(1)

    @pl.when(s == 0)
    def _():
        if pooling_type == "mean":
            acc_ref[...] = jnp.zeros_like(acc_ref)
        else:  # max
            acc_ref[...] = jnp.full_like(acc_ref, -jnp.inf)

    hblk = h_ref[...]                                   # (TB, TS, H), model dtype
    if pooling_type == "mean":
        acc_ref[...] += jnp.sum(hblk, axis=1, dtype=jnp.float32)
    else:
        acc_ref[...] = jnp.maximum(acc_ref[...],
                                   jnp.max(hblk, axis=1).astype(jnp.float32))

    @pl.when(s == pl.num_programs(1) - 1)
    def _():
        x = acc_ref[...]
        if pooling_type == "mean":
            x = x * (1.0 / float(seq_len))
        y = _dense_tanh_ln(x, w_ref[...], b_ref[...], g_ref[...],
                           beta_ref[...], eps)
        o_ref[...] = y.astype(o_ref.dtype)


# ---------------------------------------------------------------------------
# pallas_call wrappers
# ---------------------------------------------------------------------------
def _dense_head_call(x2d, prepared, *, eps):
    n, h = x2d.shape
    w_t, bias, gamma, beta = (prepared["w_t"], prepared["b"],
                              prepared["gamma"], prepared["beta"])
    out_dtype = x2d.dtype
    itemsize = x2d.dtype.itemsize

    vmem_limit = _vmem_limit_bytes()
    w_bytes = w_t.size * w_t.dtype.itemsize
    # Budget the resident (H,H) weight (double-buffered) explicitly, then split
    # the remainder across in/out double-buffers.
    budget = min(_IN_TILE_BUDGET_BYTES,
                 max(512 * 1024, (vmem_limit - 2 * w_bytes) // 4))
    tb = _choose_dense_row_tile(n, h, itemsize, budget)

    n_pad = _round_up(n, tb)
    if n_pad != n:
        x2d = jnp.pad(x2d, ((0, n_pad - n), (0, 0)))    # fixed tile + cdiv grid
    grid = (n_pad // tb,)

    cost = pl.CostEstimate(
        flops=2 * n_pad * h * h + 8 * n_pad * h,
        transcendentals=n_pad * h,
        bytes_accessed=(n_pad * h * itemsize            # x in
                        + w_bytes                       # weight
                        + 3 * h * 4                     # bias/gamma/beta
                        + n_pad * h * itemsize))        # out

    out = pl.pallas_call(
        functools.partial(_dense_head_kernel, eps=eps),
        grid_spec=pltpu.PrefetchScalarGridSpec(
            num_scalar_prefetch=0,
            grid=grid,
            in_specs=[
                pl.BlockSpec((tb, h), lambda i: (i, 0)),
                pl.BlockSpec((h, h), lambda i: (0, 0)),   # weight stays resident
                pl.BlockSpec((1, h), lambda i: (0, 0)),
                pl.BlockSpec((1, h), lambda i: (0, 0)),
                pl.BlockSpec((1, h), lambda i: (0, 0)),
            ],
            out_specs=pl.BlockSpec((tb, h), lambda i: (i, 0)),
        ),
        out_shape=jax.ShapeDtypeStruct((n_pad, h), out_dtype),
        compiler_params=pltpu.CompilerParams(
            dimension_semantics=("parallel",),            # v7x: rows split over 2 TCs
            vmem_limit_bytes=vmem_limit),
        cost_estimate=cost,
    )(x2d, w_t, bias, gamma, beta)
    return out[:n] if n_pad != n else out


def _pool_reduce_head_call(hidden_states, prepared, *, pooling_type, eps):
    b_dim, s_dim, h = hidden_states.shape
    w_t, bias, gamma, beta = (prepared["w_t"], prepared["b"],
                              prepared["gamma"], prepared["beta"])
    out_dtype = hidden_states.dtype
    itemsize = hidden_states.dtype.itemsize

    vmem_limit = _vmem_limit_bytes()
    w_bytes = w_t.size * w_t.dtype.itemsize

    tb, b_pad = _pick_batch_tile(b_dim, cap=64)           # multiple of 8 (8,128 rule)
    if b_pad != b_dim:
        hidden_states = jnp.pad(hidden_states,
                                ((0, b_pad - b_dim), (0, 0), (0, 0)))

    # Reserve weight x2, out x2, f32 accumulator; rest goes to the streamed input.
    reserved = 2 * w_bytes + 2 * tb * h * itemsize + tb * h * 4
    budget = min(_IN_TILE_BUDGET_BYTES,
                 max(512 * 1024, (vmem_limit - reserved) // 3))
    max_ts = max(8, budget // max(1, tb * h * itemsize))
    ts = _pick_divisor_rows(s_dim, min(1024, max_ts))
    grid = (b_pad // tb, s_dim // ts)

    cost = pl.CostEstimate(
        flops=2 * b_pad * h * h + 2 * b_pad * s_dim * h,
        transcendentals=b_pad * h,
        bytes_accessed=(b_pad * s_dim * h * itemsize
                        + w_bytes
                        + 3 * h * 4
                        + b_pad * h * itemsize))

    kernel = functools.partial(_pool_reduce_head_kernel,
                               pooling_type=pooling_type, seq_len=s_dim, eps=eps)

    # TODO(synk): on v5e/v6e (VMEM headroom) pipeline_mode=pl.Buffered(3) on the
    # hidden_states spec can hide DMA jitter; kept default for portability.
    out = pl.pallas_call(
        kernel,
        grid_spec=pltpu.PrefetchScalarGridSpec(
            num_scalar_prefetch=0,
            grid=grid,
            in_specs=[
                pl.BlockSpec((tb, ts, h), lambda i, j: (i, j, 0)),
                pl.BlockSpec((h, h), lambda i, j: (0, 0)),
                pl.BlockSpec((1, h), lambda i, j: (0, 0)),
                pl.BlockSpec((1, h), lambda i, j: (0, 0)),
                pl.BlockSpec((1, h), lambda i, j: (0, 0)),
            ],
            out_specs=pl.BlockSpec((tb, h), lambda i, j: (i, 0)),
            scratch_shapes=[pltpu.VMEM((tb, h), jnp.float32)],
        ),
        out_shape=jax.ShapeDtypeStruct((b_pad, h), out_dtype),
        compiler_params=pltpu.CompilerParams(
            dimension_semantics=("parallel", "arbitrary"),
            vmem_limit_bytes=vmem_limit),
        cost_estimate=cost,
    )(hidden_states, w_t, bias, gamma, beta)
    return out[:b_dim] if b_pad != b_dim else out


# ---------------------------------------------------------------------------
# Public API
# ---------------------------------------------------------------------------
def prepare_params(params, mxu_dtype=None):
    """One-time parameter prep (outside the hot path).

    * W transposed once so the kernel runs a natural (N,H_in)@(H_in,H_out) matmul.
    * bias / gamma / beta pre-cast to f32 (no per-grid-step casts in the kernel).
    * mxu_dtype=jnp.bfloat16 feeds the v6e/v7x MXU fast path and halves the
      resident weight footprint (keep None for f32 bit-accuracy).
    """
    h = params["dense_b"].shape[0]
    w_t = jnp.asarray(params["dense_w"]).T                   # (H_in, H_out)
    if mxu_dtype is not None:
        w_t = w_t.astype(mxu_dtype)
    return {
        "w_t": w_t,
        "b": jnp.asarray(params["dense_b"], jnp.float32).reshape(1, h),
        "gamma": jnp.asarray(params["ln_gamma"], jnp.float32).reshape(1, h),
        "beta": jnp.asarray(params["ln_beta"], jnp.float32).reshape(1, h),
    }


def flex_bert_pooling_head(hidden_states, prepared_params, *,
                           pooling_type="cls", pool=True, eps=1e-12):
    """hidden_states: (B, S, H).  Returns (B, H) if pool else (B, S, H)."""
    b, s, h = hidden_states.shape
    if pool:
        if pooling_type == "cls":
            # Only the CLS row ever reaches the kernel: (B, H) not (B, S, H).
            # TODO(synk): the CLS slice could be fused via a squeezed 3-D BlockSpec
            # to avoid one extra B*H copy; kept as a wrapper slice for robustness.
            x2d = hidden_states[:, 0, :]
            return _dense_head_call(x2d, prepared_params, eps=eps)
        if pooling_type in ("mean", "max"):
            # TODO(synk): attention/padding-mask-aware pooling is not part of
            # this module's forward; padded tokens are included, as in the spec.
            return _pool_reduce_head_call(hidden_states, prepared_params,
                                          pooling_type=pooling_type, eps=eps)
        raise ValueError(f"unknown pooling_type {pooling_type!r}")
    # Per-token head: lane-dense 2-D row-tiled layout (no in-kernel reshape).
    x2d = hidden_states.reshape(b * s, h)
    out = _dense_head_call(x2d, prepared_params, eps=eps)
    return out.reshape(b, s, h)


# ---------------------------------------------------------------------------
# Synthetic params + pure-JAX reference + smoke test
# ---------------------------------------------------------------------------
def init_params(key, hidden_size):
    k_w, k_b = jax.random.split(key)
    return {
        "dense_w": jax.random.normal(k_w, (hidden_size, hidden_size),
                                     jnp.float32) * 0.02,   # (out, in)
        "dense_b": jax.random.normal(k_b, (hidden_size,), jnp.float32) * 0.02,
        "ln_gamma": jnp.ones((hidden_size,), jnp.float32),
        "ln_beta": jnp.zeros((hidden_size,), jnp.float32),
    }


def _reference(hidden_states, params, pooling_type="cls", pool=True, eps=1e-12):
    if pool:
        if pooling_type == "cls":
            x = hidden_states[:, 0]
        elif pooling_type == "mean":
            x = hidden_states.mean(axis=1)
        else:
            x = hidden_states.max(axis=1)
    else:
        x = hidden_states
    y = x @ params["dense_w"].T + params["dense_b"]
    y = jnp.tanh(y)
    mu = y.mean(-1, keepdims=True)
    var = ((y - mu) ** 2).mean(-1, keepdims=True)
    y = (y - mu) / jnp.sqrt(var + eps)
    return y * params["ln_gamma"] + params["ln_beta"]


if __name__ == "__main__":
    B, S, H = 2, 8, 32
    key = jax.random.PRNGKey(0)
    k_x, k_p = jax.random.split(key)
    hidden_states = jax.random.normal(k_x, (B, S, H), jnp.float32)
    params = init_params(k_p, H)
    prepared = prepare_params(params)    # f32 weights here; pass jnp.bfloat16 for speed

    # Pooled paths: cls / mean / max.
    for ptype in ("cls", "mean", "max"):
        out = flex_bert_pooling_head(hidden_states, prepared,
                                     pooling_type=ptype, pool=True)
        out = jax.block_until_ready(out)
        ref = _reference(hidden_states, params, pooling_type=ptype, pool=True)
        assert out.shape == (B, H), (ptype, out.shape)
        assert jnp.allclose(out, ref, atol=1e-4, rtol=1e-4), ptype

    # Per-token path (pool=False).
    out_tok = flex_bert_pooling_head(hidden_states, prepared,
                                     pooling_type="cls", pool=False)
    out_tok = jax.block_until_ready(out_tok)
    ref_tok = _reference(hidden_states, params, pool=False)
    assert out_tok.shape == (B, S, H)
    assert jnp.allclose(out_tok, ref_tok, atol=1e-4, rtol=1e-4)

    print("KERNEL_OK")
</pallas_src>

<mosaic_0001>
module attributes {stable_mosaic.version = 11 : i64} {
  func.func @_dense_head_kernel(%arg0: i32, %arg1: memref<8x32xf32, #tpu.memory_space<vmem>>, %arg2: memref<32x32xf32, #tpu.memory_space<vmem>>, %arg3: memref<1x32xf32, #tpu.memory_space<vmem>>, %arg4: memref<1x32xf32, #tpu.memory_space<vmem>>, %arg5: memref<1x32xf32, #tpu.memory_space<vmem>>, %arg6: memref<8x32xf32, #tpu.memory_space<vmem>>) attributes {dimension_semantics = [#tpu.dimension_semantics<parallel>], iteration_bounds = array<i64: 1>, scalar_prefetch = 0 : i64, scratch_operands = 0 : i64, tpu.core_type = #tpu.core_type<tc>, window_params = [{transform_indices = @transform_0, window_bounds = array<i64: 8, 32>}, {pipeline_mode = #tpu.pipeline_mode<synchronous>, transform_indices = @transform_1, window_bounds = array<i64: 32, 32>}, {pipeline_mode = #tpu.pipeline_mode<synchronous>, transform_indices = @transform_2, window_bounds = array<i64: 1, 32>}, {pipeline_mode = #tpu.pipeline_mode<synchronous>, transform_indices = @transform_3, window_bounds = array<i64: 1, 32>}, {pipeline_mode = #tpu.pipeline_mode<synchronous>, transform_indices = @transform_4, window_bounds = array<i64: 1, 32>}, {transform_indices = @transform_5, window_bounds = array<i64: 8, 32>}]} {
    %c0 = arith.constant 0 : index
    %c0_0 = arith.constant 0 : index
    %0 = vector.load %arg1[%c0, %c0_0] : memref<8x32xf32, #tpu.memory_space<vmem>>, vector<8x32xf32>
    %c0_1 = arith.constant 0 : index
    %c0_2 = arith.constant 0 : index
    %1 = vector.load %arg2[%c0_1, %c0_2] : memref<32x32xf32, #tpu.memory_space<vmem>>, vector<32x32xf32>
    %c0_3 = arith.constant 0 : index
    %c0_4 = arith.constant 0 : index
    %2 = vector.load %arg3[%c0_3, %c0_4] : memref<1x32xf32, #tpu.memory_space<vmem>>, vector<1x32xf32>
    %c0_5 = arith.constant 0 : index
    %c0_6 = arith.constant 0 : index
    %3 = vector.load %arg4[%c0_5, %c0_6] : memref<1x32xf32, #tpu.memory_space<vmem>>, vector<1x32xf32>
    %c0_7 = arith.constant 0 : index
    %c0_8 = arith.constant 0 : index
    %4 = vector.load %arg5[%c0_7, %c0_8] : memref<1x32xf32, #tpu.memory_space<vmem>>, vector<1x32xf32>
    %cst = arith.constant dense<0.000000e+00> : vector<8x32xf32>
    %5 = tpu.matmul %0, %1, %cst {dimension_numbers = #tpu.dot_dimension_numbers<[1], [0], [0], [1], [0, 0, 1, 1], [], []>} : vector<8x32xf32>, vector<32x32xf32>, vector<8x32xf32> -> vector<8x32xf32>
    %6 = vector.broadcast %2 : vector<1x32xf32> to vector<8x32xf32>
    %7 = arith.addf %5, %6 : vector<8x32xf32>
    %8 = math.tanh %7 : vector<8x32xf32>
    %cst_9 = arith.constant dense<0.000000e+00> : vector<8xf32>
    %9 = vector.multi_reduction <add>, %8, %cst_9 [1] : vector<8x32xf32> to vector<8xf32>
    %10 = vector.shape_cast %9 : vector<8xf32> to vector<8x1xf32>
    %cst_10 = arith.constant 3.125000e-02 : f32
    %11 = vector.broadcast %cst_10 : f32 to vector<8x1xf32>
    %12 = arith.mulf %10, %11 : vector<8x1xf32>
    %13 = arith.mulf %8, %8 : vector<8x32xf32>
    %cst_11 = arith.constant dense<0.000000e+00> : vector<8xf32>
    %14 = vector.multi_reduction <add>, %13, %cst_11 [1] : vector<8x32xf32> to vector<8xf32>
    %15 = vector.shape_cast %14 : vector<8xf32> to vector<8x1xf32>
    %cst_12 = arith.constant 3.125000e-02 : f32
    %16 = vector.broadcast %cst_12 : f32 to vector<8x1xf32>
    %17 = arith.mulf %15, %16 : vector<8x1xf32>
    %18 = arith.mulf %12, %12 : vector<8x1xf32>
    %19 = arith.subf %17, %18 : vector<8x1xf32>
    %cst_13 = arith.constant 0.000000e+00 : f32
    %20 = vector.broadcast %cst_13 : f32 to vector<8x1xf32>
    %21 = arith.maximumf %19, %20 : vector<8x1xf32>
    %22 = vector.broadcast %12 : vector<8x1xf32> to vector<8x32xf32>
    %23 = arith.subf %8, %22 : vector<8x32xf32>
    %cst_14 = arith.constant 9.99999996E-13 : f32
    %24 = vector.broadcast %cst_14 : f32 to vector<8x1xf32>
    %25 = arith.addf %21, %24 : vector<8x1xf32>
    %26 = math.rsqrt %25 : vector<8x1xf32>
    %27 = vector.broadcast %26 : vector<8x1xf32> to vector<8x32xf32>
    %28 = arith.mulf %23, %27 : vector<8x32xf32>
    %29 = vector.broadcast %3 : vector<1x32xf32> to vector<8x32xf32>
    %30 = arith.mulf %28, %29 : vector<8x32xf32>
    %31 = vector.broadcast %4 : vector<1x32xf32> to vector<8x32xf32>
    %32 = arith.addf %30, %31 : vector<8x32xf32>
    %c0_15 = arith.constant 0 : index
    %c0_16 = arith.constant 0 : index
    %33 = vector.load %arg6[%c0_15, %c0_16] : memref<8x32xf32, #tpu.memory_space<vmem>>, vector<8x32xf32>
    tpu.vector_store %arg6[%c0_15, %c0_16], %32 {strides = array<i32>} : memref<8x32xf32, #tpu.memory_space<vmem>>, vector<8x32xf32>,
    return
  }
  func.func @transform_0(%arg0: i32) -> (i32, i32) {
    %c0_i32 = arith.constant 0 : i32
    %c0_i32_0 = arith.constant 0 : i32
    return %arg0, %c0_i32 : i32, i32
  }
  func.func @transform_1(%arg0: i32) -> (i32, i32) {
    %c0_i32 = arith.constant 0 : i32
    %c0_i32_0 = arith.constant 0 : i32
    %c0_i32_1 = arith.constant 0 : i32
    return %c0_i32, %c0_i32_0 : i32, i32
  }
  func.func @transform_2(%arg0: i32) -> (i32, i32) {
    %c0_i32 = arith.constant 0 : i32
    %c0_i32_0 = arith.constant 0 : i32
    %c0_i32_1 = arith.constant 0 : i32
    return %c0_i32, %c0_i32_0 : i32, i32
  }
  func.func @transform_3(%arg0: i32) -> (i32, i32) {
    %c0_i32 = arith.constant 0 : i32
    %c0_i32_0 = arith.constant 0 : i32
    %c0_i32_1 = arith.constant 0 : i32
    return %c0_i32, %c0_i32_0 : i32, i32
  }
  func.func @transform_4(%arg0: i32) -> (i32, i32) {
    %c0_i32 = arith.constant 0 : i32
    %c0_i32_0 = arith.constant 0 : i32
    %c0_i32_1 = arith.constant 0 : i32
    return %c0_i32, %c0_i32_0 : i32, i32
  }
  func.func @transform_5(%arg0: i32) -> (i32, i32) {
    %c0_i32 = arith.constant 0 : i32
    %c0_i32_0 = arith.constant 0 : i32
    return %arg0, %c0_i32 : i32, i32
  }
}

</mosaic_0001>

<llo_original>
// kernel: tpu_custom_call.1
$region0: #{tpu_custom_call.1}
  #allocation0 [shape = 'u32[]', space=smem, size = 0x4, offset = 0x4, fixed_abs, tag = 'smem constant byte address 0x4 - core index']
  #allocation1 [shape = 'u32[144,128]{1,0:T(1,128)}', space=vmem, size = 0x12000, scoped, tag = 'internal scratch']
  %s0 = inlined_call_operand.hbm [shape: f32[8,32], index: 0, kind: input, shape index: {}]
  %s1 = inlined_call_operand.hbm [shape: f32[32,32], index: 1, kind: input, shape index: {}]
  %s2 = inlined_call_operand.vmem [shape: f32[1,32], index: 2, kind: input, shape index: {}]
  %s3 = inlined_call_operand.vmem [shape: f32[1,32], index: 3, kind: input, shape index: {}]
  %s4 = inlined_call_operand.vmem [shape: f32[1,32], index: 4, kind: input, shape index: {}]
  %s5 = inlined_call_operand.hbm [shape: f32[8,32], index: 5, kind: output, shape index: {}]
  %s6 = sld [smem:[#allocation0]]
  $region38: #{tpu_custom_call.1} parent=0
    _
  %s8 = ssub.s32 1, %s6
  %s9 = scalar_select 0, %s8, %s6
  $region1: #{tpu_custom_call.1} parent=0
    #allocation2 [shape = 'u8[4096]{0}', space=vmem, size = 0x1000, scoped, tag = 'input window, operand 0, single buffered']
    #allocation3 [shape = 's32[1]{0}', space=sflag, size = 0x4, scoped, tag = 'scoped memory for tpu_custom_call.1']
    #allocation4 [shape = 's32[1]{0}', space=sflag, size = 0x4, scoped, tag = 'scoped memory for tpu_custom_call.1']
    #allocation5 [shape = 'u8[16384]{0}', space=vmem, size = 0x4000, scoped, tag = 'input window, operand 1, single buffered']
    #allocation6 [shape = 's32[1]{0}', space=sflag, size = 0x4, scoped, tag = 'scoped memory for tpu_custom_call.1']
    #allocation7 [shape = 'u8[4096]{0}', space=vmem, size = 0x1000, scoped, tag = 'output window, operand 0, single buffered']
    %10 = vsyncpa [#allocation3], 0
    %11 = vsyncpa [#allocation6], 0
    %12 = vsyncpa [#allocation4], 0
    // Predicated region
    $region2: #{tpu_custom_call.1} parent=1 // pred_check
      _
    $region3: #{tpu_custom_call.1} parent=1 // pred_check_branch
      %14 = sbr.rel (0) target = $region5
    $region4: #{tpu_custom_call.1} parent=1 // pred_region
      %s16 = ssub.s32 128, 128
      %17 = vsyncadd [#allocation3], %s16
      %s19 = sshll.u32 [#allocation2], 4
      %s20 = int_to_ptr.vmem [resolvable:$true] %s19
      %22 = dma.hbm_to_vmem [thread:$0]  %s0, 128, %s20, [#allocation3]
    $region5: #{tpu_custom_call.1} parent=1 // pred_fallthru
      _
    // Predicated region
    $region6: #{tpu_custom_call.1} parent=1 // pred_check
      _
    $region7: #{tpu_custom_call.1} parent=1 // pred_check_branch
      %24 = sbr.rel (0) target = $region9
    $region8: #{tpu_custom_call.1} parent=1 // pred_region
      %s26 = ssub.s32 512, 512
      %27 = vsyncadd [#allocation6], %s26
      %s28 = sshll.u32 [#allocation5], 4
      %s29 = int_to_ptr.vmem [resolvable:$true] %s28
      %34 = dma.hbm_to_vmem [thread:$0]  %s1, 512, %s29, [#allocation6], 128, 128, 8
    $region9: #{tpu_custom_call.1} parent=1 // pred_fallthru
      _
    // Predicated region
    $region10: #{tpu_custom_call.1} parent=1 // pred_check
      _
    $region11: #{tpu_custom_call.1} parent=1 // pred_check_branch
      %36 = sbr.rel (0) target = $region13
    $region12: #{tpu_custom_call.1} parent=1 // pred_region
      _
    $region13: #{tpu_custom_call.1} parent=1 // pred_fallthru
      _
    // Predicated region
    $region14: #{tpu_custom_call.1} parent=1 // pred_check
      _
    $region15: #{tpu_custom_call.1} parent=1 // pred_check_branch
      %38 = sbr.rel (0) target = $region17
    $region16: #{tpu_custom_call.1} parent=1 // pred_region
      _
    $region17: #{tpu_custom_call.1} parent=1 // pred_fallthru
      _
    // Predicated region
    $region18: #{tpu_custom_call.1} parent=1 // pred_check
      _
    $region19: #{tpu_custom_call.1} parent=1 // pred_check_branch
      %40 = sbr.rel (0) target = $region21
    $region20: #{tpu_custom_call.1} parent=1 // pred_region
      _
    $region21: #{tpu_custom_call.1} parent=1 // pred_fallthru
      _
    // Predicated region
    $region22: #{tpu_custom_call.1} parent=1 // pred_check
      _
    $region23: #{tpu_custom_call.1} parent=1 // pred_check_branch
      %42 = sbr.rel (0) target = $region25
    $region24: #{tpu_custom_call.1} parent=1 // pred_region
      %43 = dma.done [#allocation3], 128
    $region25: #{tpu_custom_call.1} parent=1 // pred_fallthru
      _
    // Predicated region
    $region26: #{tpu_custom_call.1} parent=1 // pred_check
      _
    $region27: #{tpu_custom_call.1} parent=1 // pred_check_branch
      %45 = sbr.rel (0) target = $region29
    $region28: #{tpu_custom_call.1} parent=1 // pred_region
      %46 = dma.done [#allocation6], 512
    $region29: #{tpu_custom_call.1} parent=1 // pred_fallthru
      _
    %v47 = vld [vmem:[#allocation2] sm:$0xff]
    %v48 = vld [vmem:[#allocation5] sm:$0xff]
    %v49 = vld [vmem:[#allocation5 + $0x8] sm:$0xff]
    %v50 = vld [vmem:[#allocation5 + $0x10] sm:$0xff]
    %v51 = vld [vmem:[#allocation5 + $0x18] sm:$0xff]
    %v52 = vld [vmem:[%s2] sm:$0x1]
    %v53 = vld [vmem:[%s3] sm:$0x1]
    %v54 = vld [vmem:[%s4] sm:$0x1]
    %v56 = vlaneseq
    %v57 = vshrl.u32 %v56, 7
    %v58 = vsub.s32 0, %v57
    %v59 = vrot.slane %v52, %v58
    %vm61 = vcmask 261120
    %v63 = vsel %vm61, %v47, 0
    %65 = vmatprep.subr.mxu0 0.0
    %66 = vmatpush1.msra.mxu0 %v48
    %67 = vmatprep.subr.mxu0 0.0
    %68 = vmatpush1.msra.mxu0 %v49
    %69 = vmatprep.subr.mxu0 0.0
    %70 = vmatpush1.msra.mxu0 %v50
    %71 = vmatprep.subr.mxu0 0.0
    %72 = vmatpush1.msra.mxu0 %v51
    %73 = vmatprep.subr.mxu0 0.0
    %74 = vmatpush1.msra.mxu0 0.0
    %75 = vmatprep.subr.mxu0 0.0
    %76 = vmatpush1.msra.mxu0 0.0
    %77 = vmatprep.subr.mxu0 0.0
    %78 = vmatpush1.msra.mxu0 0.0
    %79 = vmatprep.subr.mxu0 0.0
    %80 = vmatpush1.msra.mxu0 0.0
    %81 = vmatprep.subr.mxu0 0.0
    %82 = vmatpush1.msra.mxu0 0.0
    %83 = vmatprep.subr.mxu0 0.0
    %84 = vmatpush1.msra.mxu0 0.0
    %85 = vmatprep.subr.mxu0 0.0
    %86 = vmatpush1.msra.mxu0 0.0
    %87 = vmatprep.subr.mxu0 0.0
    %88 = vmatpush1.msra.mxu0 0.0
    %89 = vmatprep.subr.mxu0 0.0
    %90 = vmatpush1.msra.mxu0 0.0
    %91 = vmatprep.subr.mxu0 0.0
    %92 = vmatpush1.msra.mxu0 0.0
    %93 = vmatprep.subr.mxu0 0.0
    %94 = vmatpush1.msra.mxu0 0.0
    %95 = vmatprep.subr.mxu0 0.0
    %96 = vmatpush1.msra.mxu0 0.0
    %97 = vmatprep.subr.mxu0 0.0
    %98 = vmatpush1.msra.mxu0 0.0
    %99 = vmatprep.subr.mxu0 0.0
    %100 = vmatpush1.msra.mxu0 0.0
    %101 = vmatprep.subr.mxu0 0.0
    %102 = vmatpush1.msra.mxu0 0.0
    %103 = vmatprep.subr.mxu0 0.0
    %104 = vmatpush1.msra.mxu0 0.0
    %105 = vmatprep.subr.mxu0 0.0
    %106 = vmatpush1.msra.mxu0 0.0
    %107 = vmatprep.subr.mxu0 0.0
    %108 = vmatpush1.msra.mxu0 0.0
    %109 = vmatprep.subr.mxu0 0.0
    %110 = vmatpush1.msra.mxu0 0.0
    %111 = vmatprep.subr.mxu0 0.0
    %112 = vmatpush1.msra.mxu0 0.0
    %113 = vmatprep.subr.mxu0 0.0
    %114 = vmatpush1.msra.mxu0 0.0
    %115 = vmatprep.subr.mxu0 0.0
    %116 = vmatpush1.msra.mxu0 0.0
    %117 = vmatprep.subr.mxu0 0.0
    %118 = vmatpush1.msra.mxu0 0.0
    %119 = vmatprep.subr.mxu0 0.0
    %120 = vmatpush1.msra.mxu0 0.0
    %121 = vmatprep.subr.mxu0 0.0
    %122 = vmatpush1.msra.mxu0 0.0
    %123 = vmatprep.subr.mxu0 0.0
    %124 = vmatpush1.msra.mxu0 0.0
    %125 = vmatprep.subr.mxu0 0.0
    %126 = vmatpush1.msra.mxu0 0.0
    %127 = vmatprep.subr.mxu0 0.0
    %128 = vmatpush1.msra.mxu0 0.0
    %129 = vmatprep.mubr.f32.mxu0 0.0
    %130 = vmatmul.mubr.f32.gmra.mrb[0].mxu0 %v63
    %v131 = vpop.f32.mrb[0].mxu0
    %v132 = vadd.f32 %v59, %v131
    %v133 = vpop.f32.mrb[0].mxu0
    %134 = vdwg.mxu0
    %v135 = vtanh.pop %v132
    %v136 = vsel %vm61, %v135, 0.0
    %137 = vadd.xlane.f32.xlu0 %v136
    %v138 = vpop.xlane.xlu0 %137
    %v139 = vmul.f32 %v138, 0.03125
    %v140 = vmul.f32 %v135, %v135
    %v141 = vsel %vm61, %v140, 0.0
    %142 = vadd.xlane.f32.xlu0 %v141
    %v143 = vpop.xlane.xlu0 %142
    %v144 = vmul.f32 %v143, 0.03125
    %v145 = vmul.f32 %v139, %v139
    %v146 = vsub.f32 %v144, %v145
    %v147 = vmax.f32 %v146, 0.0
    %v148 = vsub.f32 %v135, %v139
    %v149 = vadd.f32 %v147, 1e-12
    %v150 = vrsqrt.pop %v149
    %v151 = vmul.f32 %v148, %v150
    %v153 = vlaneseq
    %v154 = vshrl.u32 %v153, 7
    %v155 = vsub.s32 0, %v154
    %v156 = vrot.slane %v53, %v155
    %v158 = vmul.f32 %v151, %v156
    %v160 = vlaneseq
    %v161 = vshrl.u32 %v160, 7
    %v162 = vsub.s32 0, %v161
    %v163 = vrot.slane %v54, %v162
    %v165 = vadd.f32 %v158, %v163
    %166 = vst.msk [vmem:[#allocation7] sm:$0xff] %vm61, %v165
    // Predicated region
    $region30: #{tpu_custom_call.1} parent=1 // pred_check
      _
    $region31: #{tpu_custom_call.1} parent=1 // pred_check_branch
      %168 = sbr.rel (0) target = $region33
    $region32: #{tpu_custom_call.1} parent=1 // pred_region
      %s170 = ssub.s32 128, 128
      %171 = vsyncadd [#allocation4], %s170
      %s173 = sshll.u32 [#allocation7], 4
      %s174 = int_to_ptr.vmem [resolvable:$true] %s173
      %176 = dma.vmem_to_hbm [thread:$0]  %s174, 128, %s5, [#allocation4]
    $region33: #{tpu_custom_call.1} parent=1 // pred_fallthru
      _
    // Predicated region
    $region34: #{tpu_custom_call.1} parent=1 // pred_check
      _
    $region35: #{tpu_custom_call.1} parent=1 // pred_check_branch
      %178 = sbr.rel (0) target = $region37
    $region36: #{tpu_custom_call.1} parent=1 // pred_region
      %179 = dma.done [#allocation4], 128
    $region37: #{tpu_custom_call.1} parent=1 // pred_fallthru
      _
    %180 = vsyncpa [#allocation3], 1
    %181 = vsyncpa [#allocation6], 1
    %182 = vsyncpa [#allocation4], 1

</llo_original>
